<compile_context>
chip_gen: v7x
topology: tpu7x:2x2x1
jax: 0.10.0
libtpu: 0.0.40
codegen_flags: <defaults>
</compile_context>

<pallas_src>
import functools

import jax
import jax.numpy as jnp
from jax.experimental import pallas as pl
from jax.experimental.pallas import tpu as pltpu

_LANE = 128
_SUBLANE_BF16 = 16          # bf16 sublane packing
_MIB = 1024 * 1024


def _round_up(x, m):
    return ((x + m - 1) // m) * m


def _vmem_capacity_bytes():
    """Physical VMEM per TensorCore (128 MiB v5e/v6e, 64 MiB v7x)."""
    try:
        return int(pltpu.get_tpu_info().vmem_capacity_bytes)
    except Exception:
        return 64 * _MIB     # conservative (v7x-sized) fallback


# ---------------------------------------------------------------------------
# Resident-A kernel: the whole fused forward in one grid-less pallas_call.
# bf16 matmul operands everywhere, fp32 accumulation; `combined` stays fp32.
# ---------------------------------------------------------------------------
def _s2gc_resident_kernel(depth, inv_depth,
                          a_ref, x_ref, w1_ref, b1_ref, w2_ref, b2_ref,
                          out_ref):
    # MLP: embed1 -> relu -> embed2 (bf16 operands, fp32 accumulate).
    h = jnp.dot(x_ref[...], w1_ref[...], preferred_element_type=jnp.float32)
    h = jnp.maximum(h + b1_ref[...], 0.0)
    y0 = jnp.dot(h.astype(jnp.bfloat16), w2_ref[...],
                 preferred_element_type=jnp.float32) + b2_ref[...]

    a = a_ref[...]                         # bf16 (Npad, Npad), resident in VMEM

    def body(_, carry):
        # Carried y is bf16 (validated against a matching bf16 reference);
        # `comb` accumulates every hop in fp32.
        y_bf16, comb = carry
        y_new = jnp.dot(a, y_bf16, preferred_element_type=jnp.float32)
        return y_new.astype(jnp.bfloat16), comb + y_new

    # depth is a static Python int -> fully unroll so consecutive hops' MXU
    # pushes interleave with the fp32 accumulate VPU work.
    _, combined = jax.lax.fori_loop(
        0, depth, body, (y0.astype(jnp.bfloat16), y0), unroll=True)

    out_ref[...] = (combined * inv_depth).astype(out_ref.dtype)


# ---------------------------------------------------------------------------
# Streamed-A kernel: grid = (depth + 1, num_row_tiles), both axes 'arbitrary'.
#   pass d == 0     : MLP init for row tile i (A tiles NOT streamed)
#   pass 1..depth   : y_d[rows_i] = A[rows_i, :] @ y_{d-1}; combined += y_d
#   pass d == depth : also writes out[rows_i] = combined[rows_i] * (1/depth)
# y ping-pongs between two bf16 VMEM scratch buffers; `combined` is an fp32
# VMEM scratch accumulator.  A row tiles are streamed by the BlockSpec
# pipeline (HBM A traffic = depth * N^2 bf16 bytes).
# ---------------------------------------------------------------------------
def _s2gc_streamed_kernel(depth, inv_depth, tn,
                          a_ref, x_ref, w1_ref, b1_ref, w2_ref, b2_ref,
                          out_ref,
                          comb_ref, ya_ref, yb_ref):
    d = pl.program_id(0)
    i = pl.program_id(1)
    row0 = pl.multiple_of(i * tn, tn)

    @pl.when(d == 0)
    def _init():
        h = jnp.dot(x_ref[...], w1_ref[...], preferred_element_type=jnp.float32)
        h = jnp.maximum(h + b1_ref[...], 0.0)
        y0 = jnp.dot(h.astype(jnp.bfloat16), w2_ref[...],
                     preferred_element_type=jnp.float32) + b2_ref[...]
        comb_ref[pl.ds(row0, tn), :] = y0
        ya_ref[pl.ds(row0, tn), :] = y0.astype(ya_ref.dtype)

    def _hop(src_ref, dst_ref):
        y_new = jnp.dot(a_ref[...], src_ref[...],
                        preferred_element_type=jnp.float32)
        comb_ref[pl.ds(row0, tn), :] = comb_ref[pl.ds(row0, tn), :] + y_new
        dst_ref[pl.ds(row0, tn), :] = y_new.astype(dst_ref.dtype)

    # Hop d (>= 1) reads buffer (d - 1) % 2 and writes buffer d % 2.
    @pl.when(jnp.logical_and(d > 0, d % 2 == 1))
    def _hop_odd():
        _hop(ya_ref, yb_ref)

    @pl.when(jnp.logical_and(d > 0, d % 2 == 0))
    def _hop_even():
        _hop(yb_ref, ya_ref)

    @pl.when(d == depth)
    def _finalize():
        out_ref[...] = (comb_ref[pl.ds(row0, tn), :] * inv_depth).astype(out_ref.dtype)


# ---------------------------------------------------------------------------
# Wrapper
# ---------------------------------------------------------------------------
def s2gc_forward(x, a_norm, w1, b1, w2, b2, depth, *, row_tile=None,
                 force_streamed=False):
    """x: (N, F) node features; a_norm: (N, N) normalized adjacency (fp32).
    w1: (F, H), b1: (1, H), w2: (H, C), b2: (1, C).  Returns (N, C) fp32."""
    if depth < 1:
        raise ValueError("S2GC depth must be >= 1")
    n, f = x.shape
    hidden = w1.shape[1]
    c = w2.shape[1]
    inv_depth = 1.0 / float(depth)

    vmem_cap = _vmem_capacity_bytes()
    resident_cap = int(0.80 * vmem_cap)     # resident-A fit threshold
    streamed_cap = int(0.85 * vmem_cap)     # streamed working-set threshold

    # Pad classes to a full 128-lane slab (lane-dense stores).  Padded
    # weight/bias columns are zero, so pad lanes stay exactly zero.
    c_pad = _round_up(c, _LANE)
    w1_bf = w1.astype(jnp.bfloat16)
    b1_f = b1.astype(jnp.float32)
    w2_bf = jnp.pad(w2.astype(jnp.float32),
                    ((0, 0), (0, c_pad - c))).astype(jnp.bfloat16)
    b2_f = jnp.pad(b2.astype(jnp.float32), ((0, 0), (0, c_pad - c)))

    weight_bytes = 2 * f * hidden + 4 * hidden + 2 * hidden * c_pad + 4 * c_pad

    # Resident fit estimate at the minimal node padding (grid-less call: no
    # double buffering; includes the fp32 h intermediate + compiler slack).
    n_res = _round_up(n, _SUBLANE_BF16)
    resident_need = (
        2 * n_res * n_res                     # A (bf16, resident)
        + 2 * n_res * f                       # x (bf16)
        + weight_bytes
        + 4 * n_res * c_pad                   # out (fp32)
        + 4 * n_res * hidden                  # h (fp32 intermediate)
        + (4 + 4 + 2 + 4) * n_res * c_pad     # y0 + y_new + y(bf16) + combined
        + 4 * _MIB)                           # compiler-internal scratch slack
    streamed = force_streamed or resident_need > resident_cap

    mlp_flops = 2 * n_res * f * hidden + 2 * n_res * hidden * c_pad

    if not streamed:
        n_pad = n_res
        # Cast to bf16 FIRST, then zero-pad (no fp32 (n_pad, n_pad) intermediate).
        a_bf16 = jnp.pad(a_norm.astype(jnp.bfloat16),
                         ((0, n_pad - n), (0, n_pad - n)))
        x_bf = jnp.pad(x.astype(jnp.bfloat16), ((0, n_pad - n), (0, 0)))

        hop_flops = 2 * depth * n_pad * n_pad * c_pad
        cost = pl.CostEstimate(
            flops=mlp_flops + hop_flops,
            transcendentals=0,
            bytes_accessed=2 * n_pad * n_pad + 2 * n_pad * f + weight_bytes
            + 4 * n_pad * c_pad)
        vmem_limit = int(min(vmem_cap, max(resident_need, 32 * _MIB)))
        vmem = pl.BlockSpec(memory_space=pltpu.MemorySpace.VMEM)
        out = pl.pallas_call(
            functools.partial(_s2gc_resident_kernel, depth, inv_depth),
            out_shape=jax.ShapeDtypeStruct((n_pad, c_pad), jnp.float32),
            in_specs=[vmem] * 6,
            out_specs=vmem,
            compiler_params=pltpu.CompilerParams(vmem_limit_bytes=vmem_limit),
            cost_estimate=cost,
        )(a_bf16, x_bf, w1_bf, b1_f, w2_bf, b2_f)
        return out[:n, :c]

    # ---- streamed path ------------------------------------------------------
    if row_tile is None:
        # Bigger A row tiles amortize per-step overhead on 128 MiB parts; stay
        # small on v7x's 64 MiB VMEM.
        row_tile = 512 if vmem_cap >= 100 * _MIB else 256

    tn = min(int(row_tile), _round_up(n, _SUBLANE_BF16))
    tn = _round_up(tn, _SUBLANE_BF16)

    def _streamed_need(tn_, n_pad_):
        return (2 * 2 * tn_ * n_pad_          # double-buffered bf16 A row tile
                + 2 * 2 * tn_ * f             # double-buffered bf16 x row tile
                + 2 * weight_bytes            # (conservatively double-buffered)
                + 2 * 4 * tn_ * c_pad         # double-buffered fp32 out tile
                + 4 * n_pad_ * c_pad          # combined accumulator (fp32)
                + 2 * 2 * n_pad_ * c_pad      # y ping-pong (bf16)
                + 4 * _MIB)                   # compiler-internal scratch slack

    n_pad = _round_up(n, tn)
    # Shrink the row tile until the streamed working set fits scoped VMEM.
    while tn > _SUBLANE_BF16 and _streamed_need(tn, _round_up(n, tn)) > streamed_cap:
        tn = _round_up(max(tn // 2, _SUBLANE_BF16), _SUBLANE_BF16)
        n_pad = _round_up(n, tn)
    need = _streamed_need(tn, n_pad)
    num_tiles = n_pad // tn
    last_tile = num_tiles - 1

    a_bf16 = jnp.pad(a_norm.astype(jnp.bfloat16),
                     ((0, n_pad - n), (0, n_pad - n)))
    x_bf = jnp.pad(x.astype(jnp.bfloat16), ((0, n_pad - n), (0, 0)))

    hop_flops = 2 * depth * n_pad * n_pad * c_pad
    cost = pl.CostEstimate(
        flops=mlp_flops + hop_flops,
        transcendentals=0,
        bytes_accessed=depth * 2 * n_pad * n_pad + 2 * n_pad * f
        + weight_bytes + 4 * n_pad * c_pad)
    vmem_limit = int(min(vmem_cap, max(need, 32 * _MIB)))

    out = pl.pallas_call(
        functools.partial(_s2gc_streamed_kernel, depth, inv_depth, tn),
        out_shape=jax.ShapeDtypeStruct((n_pad, c_pad), jnp.float32),
        grid_spec=pltpu.PrefetchScalarGridSpec(
            num_scalar_prefetch=0,
            grid=(depth + 1, num_tiles),
            in_specs=[
                # A row tile: only needed for hops (d >= 1); pin the block index
                # during the d == 0 MLP pass so A is not streamed then.
                pl.BlockSpec((tn, n_pad),
                             lambda d, i: (jnp.where(d == 0, 0, i), 0)),
                # x row tile: only needed at d == 0; pin afterwards so it is not
                # re-streamed (depth)x.
                pl.BlockSpec((tn, f),
                             lambda d, i: (jnp.where(d == 0, i, last_tile), 0)),
                pl.BlockSpec((f, hidden), lambda d, i: (0, 0)),      # w1 (bf16)
                pl.BlockSpec((1, hidden), lambda d, i: (0, 0)),      # b1 (fp32)
                pl.BlockSpec((hidden, c_pad), lambda d, i: (0, 0)),  # w2 (bf16, padded)
                pl.BlockSpec((1, c_pad), lambda d, i: (0, 0)),       # b2 (fp32, padded)
            ],
            # Output rows are only written on the final (d == depth) pass; keep
            # the block index constant before that so no uninitialized buffers
            # are written back to HBM.
            out_specs=pl.BlockSpec(
                (tn, c_pad), lambda d, i: (jnp.where(d == depth, i, 0), 0)),
            scratch_shapes=[
                pltpu.VMEM((n_pad, c_pad), jnp.float32),   # combined accumulator
                pltpu.VMEM((n_pad, c_pad), jnp.bfloat16),  # y (written on even hops)
                pltpu.VMEM((n_pad, c_pad), jnp.bfloat16),  # y (written on odd hops)
            ]),
        # Each hop needs the full y of the previous hop, and rows within a hop
        # carry scratch state -> both axes 'arbitrary' (single-TC serial chain).
        compiler_params=pltpu.CompilerParams(
            dimension_semantics=("arbitrary", "arbitrary"),
            vmem_limit_bytes=vmem_limit),
        cost_estimate=cost,
    )(a_bf16, x_bf, w1_bf, b1_f, w2_bf, b2_f)
    return out[:n, :c]


# ---------------------------------------------------------------------------
# Graph construction + references
# ---------------------------------------------------------------------------
def build_normalized_adjacency(edges, num_nodes):
    """Dense D^{-1/2} (A + I) D^{-1/2} from an (E, 2) edge list (made symmetric)."""
    a = jnp.zeros((num_nodes, num_nodes), jnp.float32)
    a = a.at[edges[:, 0], edges[:, 1]].set(1.0)
    a = a.at[edges[:, 1], edges[:, 0]].set(1.0)
    a = a + jnp.eye(num_nodes, dtype=jnp.float32)
    deg = jnp.sum(a, axis=1)
    d_inv_sqrt = 1.0 / jnp.sqrt(deg)
    return a * d_inv_sqrt[:, None] * d_inv_sqrt[None, :]


def reference_forward(x, a_norm, w1, b1, w2, b2, depth):
    hp = jax.lax.Precision.HIGHEST
    h = jnp.maximum(jnp.dot(x, w1, precision=hp) + b1, 0.0)
    y = jnp.dot(h, w2, precision=hp) + b2
    combined = y
    for _ in range(depth):
        y = jnp.dot(a_norm, y, precision=hp)
        combined = combined + y
    return combined / depth


def reference_forward_bf16(x, a_norm, w1, b1, w2, b2, depth):
    """Emulates the kernel arithmetic: bf16 matmul operands, fp32 accumulation."""
    h = jnp.dot(x.astype(jnp.bfloat16), w1.astype(jnp.bfloat16),
                preferred_element_type=jnp.float32)
    h = jnp.maximum(h + b1, 0.0)
    y = jnp.dot(h.astype(jnp.bfloat16), w2.astype(jnp.bfloat16),
                preferred_element_type=jnp.float32) + b2
    combined = y
    a_bf = a_norm.astype(jnp.bfloat16)
    for _ in range(depth):
        y = jnp.dot(a_bf, y.astype(jnp.bfloat16),
                    preferred_element_type=jnp.float32)
        combined = combined + y
    return combined / depth


if __name__ == "__main__":
    key = jax.random.PRNGKey(0)
    k_x, k_w1, k_b1, k_w2, k_b2, k_x2 = jax.random.split(key, 6)

    # ---- test 1: 8 nodes, 16 feats, 32 hidden, 4 classes, depth 16 ----------
    N, FEATS, HIDDEN, CLASSES, DEPTH = 8, 16, 32, 4, 16

    x = jax.random.normal(k_x, (N, FEATS), jnp.float32)
    # Synthetic parameters (nn.Linear shapes, stored pre-transposed: x @ W).
    w1 = jax.random.normal(k_w1, (FEATS, HIDDEN), jnp.float32) * 0.1
    b1 = jax.random.normal(k_b1, (1, HIDDEN), jnp.float32) * 0.1
    w2 = jax.random.normal(k_w2, (HIDDEN, CLASSES), jnp.float32) * 0.1
    b2 = jax.random.normal(k_b2, (1, CLASSES), jnp.float32) * 0.1

    # Deterministic ring graph edge list.
    edges = jnp.stack(
        [jnp.arange(N, dtype=jnp.int32), (jnp.arange(N, dtype=jnp.int32) + 1) % N],
        axis=1)
    a_norm = build_normalized_adjacency(edges, N)

    out_resident = jax.block_until_ready(
        s2gc_forward(x, a_norm, w1, b1, w2, b2, DEPTH))
    out_streamed = jax.block_until_ready(
        s2gc_forward(x, a_norm, w1, b1, w2, b2, DEPTH, force_streamed=True))

    ref_fp32 = reference_forward(x, a_norm, w1, b1, w2, b2, DEPTH)
    ref_bf16 = reference_forward_bf16(x, a_norm, w1, b1, w2, b2, DEPTH)

    assert out_resident.shape == (N, CLASSES)
    assert out_streamed.shape == (N, CLASSES)
    # Tight check against a reference that matches the kernel arithmetic.
    assert jnp.allclose(out_resident, ref_bf16, atol=1e-2, rtol=1e-2)
    assert jnp.allclose(out_streamed, ref_bf16, atol=1e-2, rtol=1e-2)
    # Relaxed check against the pure-fp32 reference (bounded bf16 drift).
    assert jnp.allclose(out_resident, ref_fp32, atol=5e-2, rtol=5e-2)
    assert jnp.allclose(out_streamed, ref_fp32, atol=5e-2, rtol=5e-2)
    # Both kernel paths compute the same math.
    assert jnp.allclose(out_resident, out_streamed, atol=1e-3, rtol=1e-3)

    # ---- test 2: multi-tile streamed path (exercises index-map pinning) -----
    N2, DEPTH2, TILE2 = 40, 4, 16
    x2 = jax.random.normal(k_x2, (N2, FEATS), jnp.float32)
    edges2 = jnp.stack(
        [jnp.arange(N2, dtype=jnp.int32), (jnp.arange(N2, dtype=jnp.int32) + 1) % N2],
        axis=1)
    a_norm2 = build_normalized_adjacency(edges2, N2)

    out2_streamed = jax.block_until_ready(
        s2gc_forward(x2, a_norm2, w1, b1, w2, b2, DEPTH2,
                     row_tile=TILE2, force_streamed=True))
    out2_resident = jax.block_until_ready(
        s2gc_forward(x2, a_norm2, w1, b1, w2, b2, DEPTH2))
    ref2_bf16 = reference_forward_bf16(x2, a_norm2, w1, b1, w2, b2, DEPTH2)

    assert out2_streamed.shape == (N2, CLASSES)
    assert jnp.allclose(out2_streamed, ref2_bf16, atol=1e-2, rtol=1e-2)
    assert jnp.allclose(out2_resident, ref2_bf16, atol=1e-2, rtol=1e-2)
    assert jnp.allclose(out2_streamed, out2_resident, atol=1e-3, rtol=1e-3)

    print("KERNEL_OK")
</pallas_src>

<mosaic_0001>
module attributes {stable_mosaic.version = 11 : i64} {
  func.func @_s2gc_resident_kernel(%arg0: memref<16x16xbf16, #tpu.memory_space<vmem>>, %arg1: memref<16x16xbf16, #tpu.memory_space<vmem>>, %arg2: memref<16x32xbf16, #tpu.memory_space<vmem>>, %arg3: memref<1x32xf32, #tpu.memory_space<vmem>>, %arg4: memref<32x128xbf16, #tpu.memory_space<vmem>>, %arg5: memref<1x128xf32, #tpu.memory_space<vmem>>, %arg6: memref<16x128xf32, #tpu.memory_space<vmem>>) attributes {dimension_semantics = [], scalar_prefetch = 0 : i64, scratch_operands = 0 : i64, tpu.core_type = #tpu.core_type<tc>} {
    %c0 = arith.constant 0 : index
    %c0_0 = arith.constant 0 : index
    %0 = vector.load %arg1[%c0, %c0_0] : memref<16x16xbf16, #tpu.memory_space<vmem>>, vector<16x16xbf16>
    %c0_1 = arith.constant 0 : index
    %c0_2 = arith.constant 0 : index
    %1 = vector.load %arg2[%c0_1, %c0_2] : memref<16x32xbf16, #tpu.memory_space<vmem>>, vector<16x32xbf16>
    %cst = arith.constant dense<0.000000e+00> : vector<16x32xf32>
    %2 = tpu.matmul %0, %1, %cst {dimension_numbers = #tpu.dot_dimension_numbers<[1], [0], [0], [1], [0, 0, 1, 1], [], []>} : vector<16x16xbf16>, vector<16x32xbf16>, vector<16x32xf32> -> vector<16x32xf32>
    %c0_3 = arith.constant 0 : index
    %c0_4 = arith.constant 0 : index
    %3 = vector.load %arg3[%c0_3, %c0_4] : memref<1x32xf32, #tpu.memory_space<vmem>>, vector<1x32xf32>
    %4 = vector.broadcast %3 : vector<1x32xf32> to vector<16x32xf32>
    %5 = arith.addf %2, %4 : vector<16x32xf32>
    %cst_5 = arith.constant 0.000000e+00 : f32
    %6 = vector.broadcast %cst_5 : f32 to vector<16x32xf32>
    %7 = arith.maximumf %5, %6 : vector<16x32xf32>
    %8 = arith.truncf %7 : vector<16x32xf32> to vector<16x32xbf16>
    %c0_6 = arith.constant 0 : index
    %c0_7 = arith.constant 0 : index
    %9 = vector.load %arg4[%c0_6, %c0_7] : memref<32x128xbf16, #tpu.memory_space<vmem>>, vector<32x128xbf16>
    %cst_8 = arith.constant dense<0.000000e+00> : vector<16x128xf32>
    %10 = tpu.matmul %8, %9, %cst_8 {dimension_numbers = #tpu.dot_dimension_numbers<[1], [0], [0], [1], [0, 0, 1, 1], [], []>} : vector<16x32xbf16>, vector<32x128xbf16>, vector<16x128xf32> -> vector<16x128xf32>
    %c0_9 = arith.constant 0 : index
    %c0_10 = arith.constant 0 : index
    %11 = vector.load %arg5[%c0_9, %c0_10] : memref<1x128xf32, #tpu.memory_space<vmem>>, vector<1x128xf32>
    %12 = vector.broadcast %11 : vector<1x128xf32> to vector<16x128xf32>
    %13 = arith.addf %10, %12 : vector<16x128xf32>
    %c0_11 = arith.constant 0 : index
    %c0_12 = arith.constant 0 : index
    %14 = vector.load %arg0[%c0_11, %c0_12] : memref<16x16xbf16, #tpu.memory_space<vmem>>, vector<16x16xbf16>
    %15 = arith.truncf %13 : vector<16x128xf32> to vector<16x128xbf16>
    %c0_i32 = arith.constant 0 : i32
    %cst_13 = arith.constant dense<0.000000e+00> : vector<16x128xf32>
    %16 = tpu.matmul %14, %15, %cst_13 {dimension_numbers = #tpu.dot_dimension_numbers<[1], [0], [0], [1], [0, 0, 1, 1], [], []>} : vector<16x16xbf16>, vector<16x128xbf16>, vector<16x128xf32> -> vector<16x128xf32>
    %17 = arith.truncf %16 : vector<16x128xf32> to vector<16x128xbf16>
    %18 = arith.addf %13, %16 : vector<16x128xf32>
    %c1_i32 = arith.constant 1 : i32
    %cst_14 = arith.constant dense<0.000000e+00> : vector<16x128xf32>
    %19 = tpu.matmul %14, %17, %cst_14 {dimension_numbers = #tpu.dot_dimension_numbers<[1], [0], [0], [1], [0, 0, 1, 1], [], []>} : vector<16x16xbf16>, vector<16x128xbf16>, vector<16x128xf32> -> vector<16x128xf32>
    %20 = arith.truncf %19 : vector<16x128xf32> to vector<16x128xbf16>
    %21 = arith.addf %18, %19 : vector<16x128xf32>
    %c2_i32 = arith.constant 2 : i32
    %cst_15 = arith.constant dense<0.000000e+00> : vector<16x128xf32>
    %22 = tpu.matmul %14, %20, %cst_15 {dimension_numbers = #tpu.dot_dimension_numbers<[1], [0], [0], [1], [0, 0, 1, 1], [], []>} : vector<16x16xbf16>, vector<16x128xbf16>, vector<16x128xf32> -> vector<16x128xf32>
    %23 = arith.truncf %22 : vector<16x128xf32> to vector<16x128xbf16>
    %24 = arith.addf %21, %22 : vector<16x128xf32>
    %c3_i32 = arith.constant 3 : i32
    %cst_16 = arith.constant dense<0.000000e+00> : vector<16x128xf32>
    %25 = tpu.matmul %14, %23, %cst_16 {dimension_numbers = #tpu.dot_dimension_numbers<[1], [0], [0], [1], [0, 0, 1, 1], [], []>} : vector<16x16xbf16>, vector<16x128xbf16>, vector<16x128xf32> -> vector<16x128xf32>
    %26 = arith.truncf %25 : vector<16x128xf32> to vector<16x128xbf16>
    %27 = arith.addf %24, %25 : vector<16x128xf32>
    %c4_i32 = arith.constant 4 : i32
    %cst_17 = arith.constant dense<0.000000e+00> : vector<16x128xf32>
    %28 = tpu.matmul %14, %26, %cst_17 {dimension_numbers = #tpu.dot_dimension_numbers<[1], [0], [0], [1], [0, 0, 1, 1], [], []>} : vector<16x16xbf16>, vector<16x128xbf16>, vector<16x128xf32> -> vector<16x128xf32>
    %29 = arith.truncf %28 : vector<16x128xf32> to vector<16x128xbf16>
    %30 = arith.addf %27, %28 : vector<16x128xf32>
    %c5_i32 = arith.constant 5 : i32
    %cst_18 = arith.constant dense<0.000000e+00> : vector<16x128xf32>
    %31 = tpu.matmul %14, %29, %cst_18 {dimension_numbers = #tpu.dot_dimension_numbers<[1], [0], [0], [1], [0, 0, 1, 1], [], []>} : vector<16x16xbf16>, vector<16x128xbf16>, vector<16x128xf32> -> vector<16x128xf32>
    %32 = arith.truncf %31 : vector<16x128xf32> to vector<16x128xbf16>
    %33 = arith.addf %30, %31 : vector<16x128xf32>
    %c6_i32 = arith.constant 6 : i32
    %cst_19 = arith.constant dense<0.000000e+00> : vector<16x128xf32>
    %34 = tpu.matmul %14, %32, %cst_19 {dimension_numbers = #tpu.dot_dimension_numbers<[1], [0], [0], [1], [0, 0, 1, 1], [], []>} : vector<16x16xbf16>, vector<16x128xbf16>, vector<16x128xf32> -> vector<16x128xf32>
    %35 = arith.truncf %34 : vector<16x128xf32> to vector<16x128xbf16>
    %36 = arith.addf %33, %34 : vector<16x128xf32>
    %c7_i32 = arith.constant 7 : i32
    %cst_20 = arith.constant dense<0.000000e+00> : vector<16x128xf32>
    %37 = tpu.matmul %14, %35, %cst_20 {dimension_numbers = #tpu.dot_dimension_numbers<[1], [0], [0], [1], [0, 0, 1, 1], [], []>} : vector<16x16xbf16>, vector<16x128xbf16>, vector<16x128xf32> -> vector<16x128xf32>
    %38 = arith.truncf %37 : vector<16x128xf32> to vector<16x128xbf16>
    %39 = arith.addf %36, %37 : vector<16x128xf32>
    %c8_i32 = arith.constant 8 : i32
    %cst_21 = arith.constant dense<0.000000e+00> : vector<16x128xf32>
    %40 = tpu.matmul %14, %38, %cst_21 {dimension_numbers = #tpu.dot_dimension_numbers<[1], [0], [0], [1], [0, 0, 1, 1], [], []>} : vector<16x16xbf16>, vector<16x128xbf16>, vector<16x128xf32> -> vector<16x128xf32>
    %41 = arith.truncf %40 : vector<16x128xf32> to vector<16x128xbf16>
    %42 = arith.addf %39, %40 : vector<16x128xf32>
    %c9_i32 = arith.constant 9 : i32
    %cst_22 = arith.constant dense<0.000000e+00> : vector<16x128xf32>
    %43 = tpu.matmul %14, %41, %cst_22 {dimension_numbers = #tpu.dot_dimension_numbers<[1], [0], [0], [1], [0, 0, 1, 1], [], []>} : vector<16x16xbf16>, vector<16x128xbf16>, vector<16x128xf32> -> vector<16x128xf32>
    %44 = arith.truncf %43 : vector<16x128xf32> to vector<16x128xbf16>
    %45 = arith.addf %42, %43 : vector<16x128xf32>
    %c10_i32 = arith.constant 10 : i32
    %cst_23 = arith.constant dense<0.000000e+00> : vector<16x128xf32>
    %46 = tpu.matmul %14, %44, %cst_23 {dimension_numbers = #tpu.dot_dimension_numbers<[1], [0], [0], [1], [0, 0, 1, 1], [], []>} : vector<16x16xbf16>, vector<16x128xbf16>, vector<16x128xf32> -> vector<16x128xf32>
    %47 = arith.truncf %46 : vector<16x128xf32> to vector<16x128xbf16>
    %48 = arith.addf %45, %46 : vector<16x128xf32>
    %c11_i32 = arith.constant 11 : i32
    %cst_24 = arith.constant dense<0.000000e+00> : vector<16x128xf32>
    %49 = tpu.matmul %14, %47, %cst_24 {dimension_numbers = #tpu.dot_dimension_numbers<[1], [0], [0], [1], [0, 0, 1, 1], [], []>} : vector<16x16xbf16>, vector<16x128xbf16>, vector<16x128xf32> -> vector<16x128xf32>
    %50 = arith.truncf %49 : vector<16x128xf32> to vector<16x128xbf16>
    %51 = arith.addf %48, %49 : vector<16x128xf32>
    %c12_i32 = arith.constant 12 : i32
    %cst_25 = arith.constant dense<0.000000e+00> : vector<16x128xf32>
    %52 = tpu.matmul %14, %50, %cst_25 {dimension_numbers = #tpu.dot_dimension_numbers<[1], [0], [0], [1], [0, 0, 1, 1], [], []>} : vector<16x16xbf16>, vector<16x128xbf16>, vector<16x128xf32> -> vector<16x128xf32>
    %53 = arith.truncf %52 : vector<16x128xf32> to vector<16x128xbf16>
    %54 = arith.addf %51, %52 : vector<16x128xf32>
    %c13_i32 = arith.constant 13 : i32
    %cst_26 = arith.constant dense<0.000000e+00> : vector<16x128xf32>
    %55 = tpu.matmul %14, %53, %cst_26 {dimension_numbers = #tpu.dot_dimension_numbers<[1], [0], [0], [1], [0, 0, 1, 1], [], []>} : vector<16x16xbf16>, vector<16x128xbf16>, vector<16x128xf32> -> vector<16x128xf32>
    %56 = arith.truncf %55 : vector<16x128xf32> to vector<16x128xbf16>
    %57 = arith.addf %54, %55 : vector<16x128xf32>
    %c14_i32 = arith.constant 14 : i32
    %cst_27 = arith.constant dense<0.000000e+00> : vector<16x128xf32>
    %58 = tpu.matmul %14, %56, %cst_27 {dimension_numbers = #tpu.dot_dimension_numbers<[1], [0], [0], [1], [0, 0, 1, 1], [], []>} : vector<16x16xbf16>, vector<16x128xbf16>, vector<16x128xf32> -> vector<16x128xf32>
    %59 = arith.truncf %58 : vector<16x128xf32> to vector<16x128xbf16>
    %60 = arith.addf %57, %58 : vector<16x128xf32>
    %c15_i32 = arith.constant 15 : i32
    %cst_28 = arith.constant dense<0.000000e+00> : vector<16x128xf32>
    %61 = tpu.matmul %14, %59, %cst_28 {dimension_numbers = #tpu.dot_dimension_numbers<[1], [0], [0], [1], [0, 0, 1, 1], [], []>} : vector<16x16xbf16>, vector<16x128xbf16>, vector<16x128xf32> -> vector<16x128xf32>
    %62 = arith.truncf %61 : vector<16x128xf32> to vector<16x128xbf16>
    %63 = arith.addf %60, %61 : vector<16x128xf32>
    %cst_29 = arith.constant 6.250000e-02 : f32
    %64 = vector.broadcast %cst_29 : f32 to vector<16x128xf32>
    %65 = arith.mulf %63, %64 : vector<16x128xf32>
    %c0_30 = arith.constant 0 : index
    %c0_31 = arith.constant 0 : index
    %66 = vector.load %arg6[%c0_30, %c0_31] : memref<16x128xf32, #tpu.memory_space<vmem>>, vector<16x128xf32>
    tpu.vector_store %arg6[%c0_30, %c0_31], %65 {strides = array<i32>} : memref<16x128xf32, #tpu.memory_space<vmem>>, vector<16x128xf32>,
    return
  }
}

</mosaic_0001>

<llo_original>
// kernel: tpu_custom_call.1
$region0: #{tpu_custom_call.1}
  #allocation0 [shape = 'u32[]', space=smem, size = 0x4, offset = 0x4, fixed_abs, tag = 'smem constant byte address 0x4 - core index']
  #allocation1 [shape = 'u32[144,128]{1,0:T(1,128)}', space=vmem, size = 0x12000, scoped, tag = 'internal scratch']
  %s0 = inlined_call_operand.hbm [shape: bf16[16,16], index: 0, kind: input, shape index: {}]
  %s1 = inlined_call_operand.hbm [shape: bf16[16,16], index: 1, kind: input, shape index: {}]
  %s2 = inlined_call_operand.hbm [shape: bf16[16,32], index: 2, kind: input, shape index: {}]
  %s3 = inlined_call_operand.vmem [shape: f32[1,32], index: 3, kind: input, shape index: {}]
  %s4 = inlined_call_operand.hbm [shape: bf16[32,128], index: 4, kind: input, shape index: {}]
  %s5 = inlined_call_operand.vmem [shape: f32[1,128], index: 5, kind: input, shape index: {}]
  %s6 = inlined_call_operand.hbm [shape: f32[16,128], index: 6, kind: output, shape index: {}]
  %s7 = sld [smem:[#allocation0]]
  $region50: #{tpu_custom_call.1} parent=0
    _
  %s9 = ssub.s32 1, %s7
  %s10 = scalar_select 0, %s9, %s7
  $region1: #{tpu_custom_call.1} parent=0
    #allocation2 [shape = 'u8[4096]{0}', space=vmem, size = 0x1000, scoped, tag = 'input window, operand 0, single buffered']
    #allocation3 [shape = 's32[1]{0}', space=sflag, size = 0x4, scoped, tag = 'scoped memory for tpu_custom_call.1']
    #allocation4 [shape = 's32[1]{0}', space=sflag, size = 0x4, scoped, tag = 'scoped memory for tpu_custom_call.1']
    #allocation5 [shape = 'u8[4096]{0}', space=vmem, size = 0x1000, scoped, tag = 'input window, operand 1, single buffered']
    #allocation6 [shape = 's32[1]{0}', space=sflag, size = 0x4, scoped, tag = 'scoped memory for tpu_custom_call.1']
    #allocation7 [shape = 'u8[4096]{0}', space=vmem, size = 0x1000, scoped, tag = 'input window, operand 2, single buffered']
    #allocation8 [shape = 'u8[8192]{0}', space=vmem, size = 0x2000, scoped, tag = 'input window, operand 4, single buffered']
    #allocation9 [shape = 's32[1]{0}', space=sflag, size = 0x4, scoped, tag = 'scoped memory for tpu_custom_call.1']
    #allocation10 [shape = 'u8[8192]{0}', space=vmem, size = 0x2000, scoped, tag = 'output window, operand 0, single buffered']
    %11 = vsyncpa [#allocation3], 0
    %12 = vsyncpa [#allocation6], 0
    %13 = vsyncpa [#allocation9], 0
    %14 = vsyncpa [#allocation4], 0
    // Predicated region
    $region2: #{tpu_custom_call.1} parent=1 // pred_check
      _
    $region3: #{tpu_custom_call.1} parent=1 // pred_check_branch
      %16 = sbr.rel (0) target = $region5
    $region4: #{tpu_custom_call.1} parent=1 // pred_region
      %s18 = ssub.s32 128, 128
      %19 = vsyncadd [#allocation3], %s18
      %s20 = sshll.u32 [#allocation2], 4
      %s21 = int_to_ptr.vmem [resolvable:$true] %s20
      %26 = dma.hbm_to_vmem [thread:$0]  %s0, 128, %s21, [#allocation3], 64, 64, 4
    $region5: #{tpu_custom_call.1} parent=1 // pred_fallthru
      _
    // Predicated region
    $region6: #{tpu_custom_call.1} parent=1 // pred_check
      _
    $region7: #{tpu_custom_call.1} parent=1 // pred_check_branch
      %28 = sbr.rel (0) target = $region9
    $region8: #{tpu_custom_call.1} parent=1 // pred_region
      %s30 = ssub.s32 128, 128
      %31 = vsyncadd [#allocation6], %s30
      %s32 = sshll.u32 [#allocation5], 4
      %s33 = int_to_ptr.vmem [resolvable:$true] %s32
      %38 = dma.hbm_to_vmem [thread:$0]  %s1, 128, %s33, [#allocation6], 64, 64, 4
    $region9: #{tpu_custom_call.1} parent=1 // pred_fallthru
      _
    // Predicated region
    $region10: #{tpu_custom_call.1} parent=1 // pred_check
      _
    $region11: #{tpu_custom_call.1} parent=1 // pred_check_branch
      %40 = sbr.rel (0) target = $region13
    $region12: #{tpu_custom_call.1} parent=1 // pred_region
      %s42 = ssub.s32 128, 128
      %43 = vsyncadd [#allocation6], %s42
      %s44 = sshll.u32 [#allocation7], 4
      %s45 = int_to_ptr.vmem [resolvable:$true] %s44
      %50 = dma.hbm_to_vmem [thread:$0]  %s2, 128, %s45, [#allocation6], 64, 64, 4
    $region13: #{tpu_custom_call.1} parent=1 // pred_fallthru
      _
    // Predicated region
    $region14: #{tpu_custom_call.1} parent=1 // pred_check
      _
    $region15: #{tpu_custom_call.1} parent=1 // pred_check_branch
      %52 = sbr.rel (0) target = $region17
    $region16: #{tpu_custom_call.1} parent=1 // pred_region
      _
    $region17: #{tpu_custom_call.1} parent=1 // pred_fallthru
      _
    // Predicated region
    $region18: #{tpu_custom_call.1} parent=1 // pred_check
      _
    $region19: #{tpu_custom_call.1} parent=1 // pred_check_branch
      %54 = sbr.rel (0) target = $region21
    $region20: #{tpu_custom_call.1} parent=1 // pred_region
      %s56 = ssub.s32 256, 256
      %57 = vsyncadd [#allocation9], %s56
      %s58 = sshll.u32 [#allocation8], 4
      %s59 = int_to_ptr.vmem [resolvable:$true] %s58
      %64 = dma.hbm_to_vmem [thread:$0]  %s4, 256, %s59, [#allocation9], 64, 64, 4
    $region21: #{tpu_custom_call.1} parent=1 // pred_fallthru
      _
    // Predicated region
    $region22: #{tpu_custom_call.1} parent=1 // pred_check
      _
    $region23: #{tpu_custom_call.1} parent=1 // pred_check_branch
      %66 = sbr.rel (0) target = $region25
    $region24: #{tpu_custom_call.1} parent=1 // pred_region
      _
    $region25: #{tpu_custom_call.1} parent=1 // pred_fallthru
      _
    // Predicated region
    $region26: #{tpu_custom_call.1} parent=1 // pred_check
      _
    $region27: #{tpu_custom_call.1} parent=1 // pred_check_branch
      %68 = sbr.rel (0) target = $region29
    $region28: #{tpu_custom_call.1} parent=1 // pred_region
      %69 = dma.done [#allocation3], 128
    $region29: #{tpu_custom_call.1} parent=1 // pred_fallthru
      _
    // Predicated region
    $region30: #{tpu_custom_call.1} parent=1 // pred_check
      _
    $region31: #{tpu_custom_call.1} parent=1 // pred_check_branch
      %71 = sbr.rel (0) target = $region33
    $region32: #{tpu_custom_call.1} parent=1 // pred_region
      %72 = dma.done [#allocation6], 128
    $region33: #{tpu_custom_call.1} parent=1 // pred_fallthru
      _
    // Predicated region
    $region34: #{tpu_custom_call.1} parent=1 // pred_check
      _
    $region35: #{tpu_custom_call.1} parent=1 // pred_check_branch
      %74 = sbr.rel (0) target = $region37
    $region36: #{tpu_custom_call.1} parent=1 // pred_region
      %75 = dma.done [#allocation6], 128
    $region37: #{tpu_custom_call.1} parent=1 // pred_fallthru
      _
    // Predicated region
    $region38: #{tpu_custom_call.1} parent=1 // pred_check
      _
    $region39: #{tpu_custom_call.1} parent=1 // pred_check_branch
      %77 = sbr.rel (0) target = $region41
    $region40: #{tpu_custom_call.1} parent=1 // pred_region
      %78 = dma.done [#allocation9], 256
    $region41: #{tpu_custom_call.1} parent=1 // pred_fallthru
      _
    %v80 = vld [vmem:[#allocation5] sm:$0xf]
    %v81 = vld [vmem:[#allocation5 + $0x4] sm:$0xf]
    %v82 = vld [vmem:[#allocation7] sm:$0xf]
    %v83 = vld [vmem:[#allocation7 + $0x4] sm:$0xf]
    %v84 = vld [vmem:[%s3] sm:$0x1]
    %v86 = vlaneseq
    %v87 = vshrl.u32 %v86, 7
    %v88 = vsub.s32 0, %v87
    %v89 = vrot.slane %v84, %v88
    %v93 = vunpack.c.l.b16 %v80
    %v94 = vunpack.c.l.b16 %v81
    %v95 = vpack.c.b16 %v94, %v93
    %v98 = vunpack.c.l.b16 %v82
    %v99 = vunpack.c.l.b16 %v83
    %v100 = vpack.c.b16 %v99, %v98
    %vm102 = vcmask 130048
    %v104 = vsel %vm102, %v95, 0
    %106 = vmatprep.subr.bf16.mxu0 0
    %107 = vmatpush1.bf16.msra.mxu0 %v100
    %108 = vmatprep.subr.bf16.mxu0 0
    %109 = vmatpush1.bf16.msra.mxu0 0
    %110 = vmatprep.subr.bf16.mxu0 0
    %111 = vmatpush1.bf16.msra.mxu0 0
    %112 = vmatprep.subr.bf16.mxu0 0
    %113 = vmatpush1.bf16.msra.mxu0 0
    %114 = vmatprep.subr.bf16.mxu0 0
    %115 = vmatpush1.bf16.msra.mxu0 0
    %116 = vmatprep.subr.bf16.mxu0 0
    %117 = vmatpush1.bf16.msra.mxu0 0
    %118 = vmatprep.subr.bf16.mxu0 0
    %119 = vmatpush1.bf16.msra.mxu0 0
    %120 = vmatprep.subr.bf16.mxu0 0
    %121 = vmatpush1.bf16.msra.mxu0 0
    %122 = vmatprep.subr.bf16.mxu0 0
    %123 = vmatpush1.bf16.msra.mxu0 0
    %124 = vmatprep.subr.bf16.mxu0 0
    %125 = vmatpush1.bf16.msra.mxu0 0
    %126 = vmatprep.subr.bf16.mxu0 0
    %127 = vmatpush1.bf16.msra.mxu0 0
    %128 = vmatprep.subr.bf16.mxu0 0
    %129 = vmatpush1.bf16.msra.mxu0 0
    %130 = vmatprep.subr.bf16.mxu0 0
    %131 = vmatpush1.bf16.msra.mxu0 0
    %132 = vmatprep.subr.bf16.mxu0 0
    %133 = vmatpush1.bf16.msra.mxu0 0
    %134 = vmatprep.subr.bf16.mxu0 0
    %135 = vmatpush1.bf16.msra.mxu0 0
    %136 = vmatprep.subr.bf16.mxu0 0
    %137 = vmatpush1.bf16.msra.mxu0 0
    %138 = vmatprep.mubr.bf16.mxu0 0
    %139 = vmatmul.mubr.bf16.gmra.mrb[0].mxu0 %v104
    %v140 = vpop.f32.mrb[0].mxu0
    %v141 = vadd.f32 %v89, %v140
    %v142 = vpop.f32.mrb[0].mxu0
    %v143 = vpop.f32.mrb[0].mxu0
    %v144 = vadd.f32 %v89, %v143
    %v145 = vpop.f32.mrb[0].mxu0
    %146 = vdwg.mxu0
    %v147 = vmax.f32 %v141, 0.0
    %v148 = vmax.f32 %v144, 0.0
    %v149 = vpack.c.bf16 %v148, %v147
    %v150 = vld [vmem:[#allocation8] sm:$0xf]
    %v151 = vld [vmem:[#allocation8 + $0x4] sm:$0xf]
    %v152 = vld [vmem:[#allocation8 + $0x8] sm:$0xf]
    %v153 = vld [vmem:[#allocation8 + $0xc] sm:$0xf]
    %v154 = vld [vmem:[%s5] sm:$0x1]
    %v156 = vlaneseq
    %v157 = vshrl.u32 %v156, 7
    %v158 = vsub.s32 0, %v157
    %v159 = vrot.slane %v154, %v158
    %v165 = vunpack.c.l.b16 %v150
    %v166 = vunpack.c.l.b16 %v151
    %v167 = vunpack.c.l.b16 %v152
    %v168 = vunpack.c.l.b16 %v153
    %v169 = vpack.c.b16 %v166, %v165
    %v170 = vpack.c.b16 %v168, %v167
    %vm173 = vcmask 261120
    %v175 = vsel %vm173, %v149, 0
    %177 = vmatprep.subr.bf16.mxu0 0
    %178 = vmatpush1.bf16.msra.mxu0 %v169
    %179 = vmatprep.subr.bf16.mxu0 0
    %180 = vmatpush1.bf16.msra.mxu0 %v170
    %181 = vmatprep.subr.bf16.mxu0 0
    %182 = vmatpush1.bf16.msra.mxu0 0
    %183 = vmatprep.subr.bf16.mxu0 0
    %184 = vmatpush1.bf16.msra.mxu0 0
    %185 = vmatprep.subr.bf16.mxu0 0
    %186 = vmatpush1.bf16.msra.mxu0 0
    %187 = vmatprep.subr.bf16.mxu0 0
    %188 = vmatpush1.bf16.msra.mxu0 0
    %189 = vmatprep.subr.bf16.mxu0 0
    %190 = vmatpush1.bf16.msra.mxu0 0
    %191 = vmatprep.subr.bf16.mxu0 0
    %192 = vmatpush1.bf16.msra.mxu0 0
    %193 = vmatprep.subr.bf16.mxu0 0
    %194 = vmatpush1.bf16.msra.mxu0 0
    %195 = vmatprep.subr.bf16.mxu0 0
    %196 = vmatpush1.bf16.msra.mxu0 0
    %197 = vmatprep.subr.bf16.mxu0 0
    %198 = vmatpush1.bf16.msra.mxu0 0
    %199 = vmatprep.subr.bf16.mxu0 0
    %200 = vmatpush1.bf16.msra.mxu0 0
    %201 = vmatprep.subr.bf16.mxu0 0
    %202 = vmatpush1.bf16.msra.mxu0 0
    %203 = vmatprep.subr.bf16.mxu0 0
    %204 = vmatpush1.bf16.msra.mxu0 0
    %205 = vmatprep.subr.bf16.mxu0 0
    %206 = vmatpush1.bf16.msra.mxu0 0
    %207 = vmatprep.subr.bf16.mxu0 0
    %208 = vmatpush1.bf16.msra.mxu0 0
    %209 = vmatprep.mubr.bf16.mxu0 0
    %210 = vmatmul.mubr.bf16.gmra.mrb[0].mxu0 %v175
    %v211 = vpop.f32.mrb[0].mxu0
    %v212 = vadd.f32 %v159, %v211
    %v213 = vpop.f32.mrb[0].mxu0
    %v214 = vpop.f32.mrb[0].mxu0
    %v215 = vadd.f32 %v159, %v214
    %v216 = vpop.f32.mrb[0].mxu0
    %217 = vdwg.mxu0
    %v218 = vld [vmem:[#allocation2] sm:$0xf]
    %v219 = vld [vmem:[#allocation2 + $0x4] sm:$0xf]
    %v220 = vpack.c.bf16 %v215, %v212
    %v223 = vunpack.c.l.b16 %v218
    %v224 = vunpack.c.l.b16 %v219
    %v225 = vpack.c.b16 %v224, %v223
    %v227 = vsel %vm102, %v225, 0
    %229 = vmatprep.subr.bf16.mxu0 0
    %230 = vmatpush1.bf16.msra.mxu0 %v220
    %231 = vmatprep.subr.bf16.mxu0 0
    %232 = vmatpush1.bf16.msra.mxu0 0
    %233 = vmatprep.subr.bf16.mxu0 0
    %234 = vmatpush1.bf16.msra.mxu0 0
    %235 = vmatprep.subr.bf16.mxu0 0
    %236 = vmatpush1.bf16.msra.mxu0 0
    %237 = vmatprep.subr.bf16.mxu0 0
    %238 = vmatpush1.bf16.msra.mxu0 0
    %239 = vmatprep.subr.bf16.mxu0 0
    %240 = vmatpush1.bf16.msra.mxu0 0
    %241 = vmatprep.subr.bf16.mxu0 0
    %242 = vmatpush1.bf16.msra.mxu0 0
    %243 = vmatprep.subr.bf16.mxu0 0
    %244 = vmatpush1.bf16.msra.mxu0 0
    %245 = vmatprep.subr.bf16.mxu0 0
    %246 = vmatpush1.bf16.msra.mxu0 0
    %247 = vmatprep.subr.bf16.mxu0 0
    %248 = vmatpush1.bf16.msra.mxu0 0
    %249 = vmatprep.subr.bf16.mxu0 0
    %250 = vmatpush1.bf16.msra.mxu0 0
    %251 = vmatprep.subr.bf16.mxu0 0
    %252 = vmatpush1.bf16.msra.mxu0 0
    %253 = vmatprep.subr.bf16.mxu0 0
    %254 = vmatpush1.bf16.msra.mxu0 0
    %255 = vmatprep.subr.bf16.mxu0 0
    %256 = vmatpush1.bf16.msra.mxu0 0
    %257 = vmatprep.subr.bf16.mxu0 0
    %258 = vmatpush1.bf16.msra.mxu0 0
    %259 = vmatprep.subr.bf16.mxu0 0
    %260 = vmatpush1.bf16.msra.mxu0 0
    %261 = vmatprep.mubr.bf16.mxu0 0
    %262 = vmatmul.mubr.bf16.gmra.mrb[0].mxu0 %v227
    %v263 = vpop.f32.mrb[0].mxu0
    %v264 = vadd.f32 0.0, %v263
    %v265 = vpop.f32.mrb[0].mxu0
    %v266 = vpop.f32.mrb[0].mxu0
    %v267 = vadd.f32 0.0, %v266
    %v268 = vpop.f32.mrb[0].mxu0
    %269 = vdwg.mxu0
    %v270 = vpack.c.bf16 %v267, %v264
    %v271 = vadd.f32 %v212, %v264
    %v272 = vadd.f32 %v215, %v267
    %273 = vmatprep.subr.bf16.mxu0 0
    %274 = vmatpush1.bf16.msra.mxu0 %v270
    %275 = vmatprep.subr.bf16.mxu0 0
    %276 = vmatpush1.bf16.msra.mxu0 0
    %277 = vmatprep.subr.bf16.mxu0 0
    %278 = vmatpush1.bf16.msra.mxu0 0
    %279 = vmatprep.subr.bf16.mxu0 0
    %280 = vmatpush1.bf16.msra.mxu0 0
    %281 = vmatprep.subr.bf16.mxu0 0
    %282 = vmatpush1.bf16.msra.mxu0 0
    %283 = vmatprep.subr.bf16.mxu0 0
    %284 = vmatpush1.bf16.msra.mxu0 0
    %285 = vmatprep.subr.bf16.mxu0 0
    %286 = vmatpush1.bf16.msra.mxu0 0
    %287 = vmatprep.subr.bf16.mxu0 0
    %288 = vmatpush1.bf16.msra.mxu0 0
    %289 = vmatprep.subr.bf16.mxu0 0
    %290 = vmatpush1.bf16.msra.mxu0 0
    %291 = vmatprep.subr.bf16.mxu0 0
    %292 = vmatpush1.bf16.msra.mxu0 0
    %293 = vmatprep.subr.bf16.mxu0 0
    %294 = vmatpush1.bf16.msra.mxu0 0
    %295 = vmatprep.subr.bf16.mxu0 0
    %296 = vmatpush1.bf16.msra.mxu0 0
    %297 = vmatprep.subr.bf16.mxu0 0
    %298 = vmatpush1.bf16.msra.mxu0 0
    %299 = vmatprep.subr.bf16.mxu0 0
    %300 = vmatpush1.bf16.msra.mxu0 0
    %301 = vmatprep.subr.bf16.mxu0 0
    %302 = vmatpush1.bf16.msra.mxu0 0
    %303 = vmatprep.subr.bf16.mxu0 0
    %304 = vmatpush1.bf16.msra.mxu0 0
    %305 = vmatprep.mubr.bf16.mxu0 0
    %306 = vmatmul.mubr.bf16.gmra.mrb[0].mxu0 %v227
    %v307 = vpop.f32.mrb[0].mxu0
    %v308 = vadd.f32 0.0, %v307
    %v309 = vpop.f32.mrb[0].mxu0
    %v310 = vpop.f32.mrb[0].mxu0
    %v311 = vadd.f32 0.0, %v310
    %v312 = vpop.f32.mrb[0].mxu0
    %313 = vdwg.mxu0
    %v314 = vpack.c.bf16 %v311, %v308
    %v315 = vadd.f32 %v271, %v308
    %v316 = vadd.f32 %v272, %v311
    %317 = vmatprep.subr.bf16.mxu0 0
    %318 = vmatpush1.bf16.msra.mxu0 %v314
    %319 = vmatprep.subr.bf16.mxu0 0
    %320 = vmatpush1.bf16.msra.mxu0 0
    %321 = vmatprep.subr.bf16.mxu0 0
    %322 = vmatpush1.bf16.msra.mxu0 0
    %323 = vmatprep.subr.bf16.mxu0 0
    %324 = vmatpush1.bf16.msra.mxu0 0
    %325 = vmatprep.subr.bf16.mxu0 0
    %326 = vmatpush1.bf16.msra.mxu0 0
    %327 = vmatprep.subr.bf16.mxu0 0
    %328 = vmatpush1.bf16.msra.mxu0 0
    %329 = vmatprep.subr.bf16.mxu0 0
    %330 = vmatpush1.bf16.msra.mxu0 0
    %331 = vmatprep.subr.bf16.mxu0 0
    %332 = vmatpush1.bf16.msra.mxu0 0
    %333 = vmatprep.subr.bf16.mxu0 0
    %334 = vmatpush1.bf16.msra.mxu0 0
    %335 = vmatprep.subr.bf16.mxu0 0
    %336 = vmatpush1.bf16.msra.mxu0 0
    %337 = vmatprep.subr.bf16.mxu0 0
    %338 = vmatpush1.bf16.msra.mxu0 0
    %339 = vmatprep.subr.bf16.mxu0 0
    %340 = vmatpush1.bf16.msra.mxu0 0
    %341 = vmatprep.subr.bf16.mxu0 0
    %342 = vmatpush1.bf16.msra.mxu0 0
    %343 = vmatprep.subr.bf16.mxu0 0
    %344 = vmatpush1.bf16.msra.mxu0 0
    %345 = vmatprep.subr.bf16.mxu0 0
    %346 = vmatpush1.bf16.msra.mxu0 0
    %347 = vmatprep.subr.bf16.mxu0 0
    %348 = vmatpush1.bf16.msra.mxu0 0
    %349 = vmatprep.mubr.bf16.mxu0 0
    %350 = vmatmul.mubr.bf16.gmra.mrb[0].mxu0 %v227
    %v351 = vpop.f32.mrb[0].mxu0
    %v352 = vadd.f32 0.0, %v351
    %v353 = vpop.f32.mrb[0].mxu0
    %v354 = vpop.f32.mrb[0].mxu0
    %v355 = vadd.f32 0.0, %v354
    %v356 = vpop.f32.mrb[0].mxu0
    %357 = vdwg.mxu0
    %v358 = vpack.c.bf16 %v355, %v352
    %v359 = vadd.f32 %v315, %v352
    %v360 = vadd.f32 %v316, %v355
    %361 = vmatprep.subr.bf16.mxu0 0
    %362 = vmatpush1.bf16.msra.mxu0 %v358
    %363 = vmatprep.subr.bf16.mxu0 0
    %364 = vmatpush1.bf16.msra.mxu0 0
    %365 = vmatprep.subr.bf16.mxu0 0
    %366 = vmatpush1.bf16.msra.mxu0 0
    %367 = vmatprep.subr.bf16.mxu0 0
    %368 = vmatpush1.bf16.msra.mxu0 0
    %369 = vmatprep.subr.bf16.mxu0 0
    %370 = vmatpush1.bf16.msra.mxu0 0
    %371 = vmatprep.subr.bf16.mxu0 0
    %372 = vmatpush1.bf16.msra.mxu0 0
    %373 = vmatprep.subr.bf16.mxu0 0
    %374 = vmatpush1.bf16.msra.mxu0 0
    %375 = vmatprep.subr.bf16.mxu0 0
    %376 = vmatpush1.bf16.msra.mxu0 0
    %377 = vmatprep.subr.bf16.mxu0 0
    %378 = vmatpush1.bf16.msra.mxu0 0
    %379 = vmatprep.subr.bf16.mxu0 0
    %380 = vmatpush1.bf16.msra.mxu0 0
    %381 = vmatprep.subr.bf16.mxu0 0
    %382 = vmatpush1.bf16.msra.mxu0 0
    %383 = vmatprep.subr.bf16.mxu0 0
    %384 = vmatpush1.bf16.msra.mxu0 0
    %385 = vmatprep.subr.bf16.mxu0 0
    %386 = vmatpush1.bf16.msra.mxu0 0
    %387 = vmatprep.subr.bf16.mxu0 0
    %388 = vmatpush1.bf16.msra.mxu0 0
    %389 = vmatprep.subr.bf16.mxu0 0
    %390 = vmatpush1.bf16.msra.mxu0 0
    %391 = vmatprep.subr.bf16.mxu0 0
    %392 = vmatpush1.bf16.msra.mxu0 0
    %393 = vmatprep.mubr.bf16.mxu0 0
    %394 = vmatmul.mubr.bf16.gmra.mrb[0].mxu0 %v227
    %v395 = vpop.f32.mrb[0].mxu0
    %v396 = vadd.f32 0.0, %v395
    %v397 = vpop.f32.mrb[0].mxu0
    %v398 = vpop.f32.mrb[0].mxu0
    %v399 = vadd.f32 0.0, %v398
    %v400 = vpop.f32.mrb[0].mxu0
    %401 = vdwg.mxu0
    %v402 = vpack.c.bf16 %v399, %v396
    %v403 = vadd.f32 %v359, %v396
    %v404 = vadd.f32 %v360, %v399
    %405 = vmatprep.subr.bf16.mxu0 0
    %406 = vmatpush1.bf16.msra.mxu0 %v402
    %407 = vmatprep.subr.bf16.mxu0 0
    %408 = vmatpush1.bf16.msra.mxu0 0
    %409 = vmatprep.subr.bf16.mxu0 0
    %410 = vmatpush1.bf16.msra.mxu0 0
    %411 = vmatprep.subr.bf16.mxu0 0
    %412 = vmatpush1.bf16.msra.mxu0 0
    %413 = vmatprep.subr.bf16.mxu0 0
    %414 = vmatpush1.bf16.msra.mxu0 0
    %415 = vmatprep.subr.bf16.mxu0 0
    %416 = vmatpush1.bf16.msra.mxu0 0
    %417 = vmatprep.subr.bf16.mxu0 0
    %418 = vmatpush1.bf16.msra.mxu0 0
    %419 = vmatprep.subr.bf16.mxu0 0
    %420 = vmatpush1.bf16.msra.mxu0 0
    %421 = vmatprep.subr.bf16.mxu0 0
    %422 = vmatpush1.bf16.msra.mxu0 0
    %423 = vmatprep.subr.bf16.mxu0 0
    %424 = vmatpush1.bf16.msra.mxu0 0
    %425 = vmatprep.subr.bf16.mxu0 0
    %426 = vmatpush1.bf16.msra.mxu0 0
    %427 = vmatprep.subr.bf16.mxu0 0
    %428 = vmatpush1.bf16.msra.mxu0 0
    %429 = vmatprep.subr.bf16.mxu0 0
    %430 = vmatpush1.bf16.msra.mxu0 0
    %431 = vmatprep.subr.bf16.mxu0 0
    %432 = vmatpush1.bf16.msra.mxu0 0
    %433 = vmatprep.subr.bf16.mxu0 0
    %434 = vmatpush1.bf16.msra.mxu0 0
    %435 = vmatprep.subr.bf16.mxu0 0
    %436 = vmatpush1.bf16.msra.mxu0 0
    %437 = vmatprep.mubr.bf16.mxu0 0
    %438 = vmatmul.mubr.bf16.gmra.mrb[0].mxu0 %v227
    %v439 = vpop.f32.mrb[0].mxu0
    %v440 = vadd.f32 0.0, %v439
    %v441 = vpop.f32.mrb[0].mxu0
    %v442 = vpop.f32.mrb[0].mxu0
    %v443 = vadd.f32 0.0, %v442
    %v444 = vpop.f32.mrb[0].mxu0
    %445 = vdwg.mxu0
    %v446 = vpack.c.bf16 %v443, %v440
    %v447 = vadd.f32 %v403, %v440
    %v448 = vadd.f32 %v404, %v443
    %449 = vmatprep.subr.bf16.mxu0 0
    %450 = vmatpush1.bf16.msra.mxu0 %v446
    %451 = vmatprep.subr.bf16.mxu0 0
    %452 = vmatpush1.bf16.msra.mxu0 0
    %453 = vmatprep.subr.bf16.mxu0 0
    %454 = vmatpush1.bf16.msra.mxu0 0
    %455 = vmatprep.subr.bf16.mxu0 0
    %456 = vmatpush1.bf16.msra.mxu0 0
    %457 = vmatprep.subr.bf16.mxu0 0
    %458 = vmatpush1.bf16.msra.mxu0 0
    %459 = vmatprep.subr.bf16.mxu0 0
    %460 = vmatpush1.bf16.msra.mxu0 0
    %461 = vmatprep.subr.bf16.mxu0 0
    %462 = vmatpush1.bf16.msra.mxu0 0
    %463 = vmatprep.subr.bf16.mxu0 0
    %464 = vmatpush1.bf16.msra.mxu0 0
    %465 = vmatprep.subr.bf16.mxu0 0
    %466 = vmatpush1.bf16.msra.mxu0 0
    %467 = vmatprep.subr.bf16.mxu0 0
    %468 = vmatpush1.bf16.msra.mxu0 0
    %469 = vmatprep.subr.bf16.mxu0 0
    %470 = vmatpush1.bf16.msra.mxu0 0
    %471 = vmatprep.subr.bf16.mxu0 0
    %472 = vmatpush1.bf16.msra.mxu0 0
    %473 = vmatprep.subr.bf16.mxu0 0
    %474 = vmatpush1.bf16.msra.mxu0 0
    %475 = vmatprep.subr.bf16.mxu0 0
    %476 = vmatpush1.bf16.msra.mxu0 0
    %477 = vmatprep.subr.bf16.mxu0 0
    %478 = vmatpush1.bf16.msra.mxu0 0
    %479 = vmatprep.subr.bf16.mxu0 0
    %480 = vmatpush1.bf16.msra.mxu0 0
    %481 = vmatprep.mubr.bf16.mxu0 0
    %482 = vmatmul.mubr.bf16.gmra.mrb[0].mxu0 %v227
    %v483 = vpop.f32.mrb[0].mxu0
    %v484 = vadd.f32 0.0, %v483
    %v485 = vpop.f32.mrb[0].mxu0
    %v486 = vpop.f32.mrb[0].mxu0
    %v487 = vadd.f32 0.0, %v486
    %v488 = vpop.f32.mrb[0].mxu0
    %489 = vdwg.mxu0
    %v490 = vpack.c.bf16 %v487, %v484
    %v491 = vadd.f32 %v447, %v484
    %v492 = vadd.f32 %v448, %v487
    %493 = vmatprep.subr.bf16.mxu0 0
    %494 = vmatpush1.bf16.msra.mxu0 %v490
    %495 = vmatprep.subr.bf16.mxu0 0
    %496 = vmatpush1.bf16.msra.mxu0 0
    %497 = vmatprep.subr.bf16.mxu0 0
    %498 = vmatpush1.bf16.msra.mxu0 0
    %499 = vmatprep.subr.bf16.mxu0 0
    %500 = vmatpush1.bf16.msra.mxu0 0
    %501 = vmatprep.subr.bf16.mxu0 0
    %502 = vmatpush1.bf16.msra.mxu0 0
    %503 = vmatprep.subr.bf16.mxu0 0
    %504 = vmatpush1.bf16.msra.mxu0 0
    %505 = vmatprep.subr.bf16.mxu0 0
    %506 = vmatpush1.bf16.msra.mxu0 0
    %507 = vmatprep.subr.bf16.mxu0 0
    %508 = vmatpush1.bf16.msra.mxu0 0
    %509 = vmatprep.subr.bf16.mxu0 0
    %510 = vmatpush1.bf16.msra.mxu0 0
    %511 = vmatprep.subr.bf16.mxu0 0
    %512 = vmatpush1.bf16.msra.mxu0 0
    %513 = vmatprep.subr.bf16.mxu0 0
    %514 = vmatpush1.bf16.msra.mxu0 0
    %515 = vmatprep.subr.bf16.mxu0 0
    %516 = vmatpush1.bf16.msra.mxu0 0
    %517 = vmatprep.subr.bf16.mxu0 0
    %518 = vmatpush1.bf16.msra.mxu0 0
    %519 = vmatprep.subr.bf16.mxu0 0
    %520 = vmatpush1.bf16.msra.mxu0 0
    %521 = vmatprep.subr.bf16.mxu0 0
    %522 = vmatpush1.bf16.msra.mxu0 0
    %523 = vmatprep.subr.bf16.mxu0 0
    %524 = vmatpush1.bf16.msra.mxu0 0
    %525 = vmatprep.mubr.bf16.mxu0 0
    %526 = vmatmul.mubr.bf16.gmra.mrb[0].mxu0 %v227
    %v527 = vpop.f32.mrb[0].mxu0
    %v528 = vadd.f32 0.0, %v527
    %v529 = vpop.f32.mrb[0].mxu0
    %v530 = vpop.f32.mrb[0].mxu0
    %v531 = vadd.f32 0.0, %v530
    %v532 = vpop.f32.mrb[0].mxu0
    %533 = vdwg.mxu0
    %v534 = vpack.c.bf16 %v531, %v528
    %v535 = vadd.f32 %v491, %v528
    %v536 = vadd.f32 %v492, %v531
    %537 = vmatprep.subr.bf16.mxu0 0
    %538 = vmatpush1.bf16.msra.mxu0 %v534
    %539 = vmatprep.subr.bf16.mxu0 0
    %540 = vmatpush1.bf16.msra.mxu0 0
    %541 = vmatprep.subr.bf16.mxu0 0
    %542 = vmatpush1.bf16.msra.mxu0 0
    %543 = vmatprep.subr.bf16.mxu0 0
    %544 = vmatpush1.bf16.msra.mxu0 0
    %545 = vmatprep.subr.bf16.mxu0 0
    %546 = vmatpush1.bf16.msra.mxu0 0
    %547 = vmatprep.subr.bf16.mxu0 0
    %548 = vmatpush1.bf16.msra.mxu0 0
    %549 = vmatprep.subr.bf16.mxu0 0
    %550 = vmatpush1.bf16.msra.mxu0 0
    %551 = vmatprep.subr.bf16.mxu0 0
    %552 = vmatpush1.bf16.msra.mxu0 0
    %553 = vmatprep.subr.bf16.mxu0 0
    %554 = vmatpush1.bf16.msra.mxu0 0
    %555 = vmatprep.subr.bf16.mxu0 0
    %556 = vmatpush1.bf16.msra.mxu0 0
    %557 = vmatprep.subr.bf16.mxu0 0
    %558 = vmatpush1.bf16.msra.mxu0 0
    %559 = vmatprep.subr.bf16.mxu0 0
    %560 = vmatpush1.bf16.msra.mxu0 0
    %561 = vmatprep.subr.bf16.mxu0 0
    %562 = vmatpush1.bf16.msra.mxu0 0
    %563 = vmatprep.subr.bf16.mxu0 0
    %564 = vmatpush1.bf16.msra.mxu0 0
    %565 = vmatprep.subr.bf16.mxu0 0
    %566 = vmatpush1.bf16.msra.mxu0 0
    %567 = vmatprep.subr.bf16.mxu0 0
    %568 = vmatpush1.bf16.msra.mxu0 0
    %569 = vmatprep.mubr.bf16.mxu0 0
    %570 = vmatmul.mubr.bf16.gmra.mrb[0].mxu0 %v227
    %v571 = vpop.f32.mrb[0].mxu0
    %v572 = vadd.f32 0.0, %v571
    %v573 = vpop.f32.mrb[0].mxu0
    %v574 = vpop.f32.mrb[0].mxu0
    %v575 = vadd.f32 0.0, %v574
    %v576 = vpop.f32.mrb[0].mxu0
    %577 = vdwg.mxu0
    %v578 = vpack.c.bf16 %v575, %v572
    %v579 = vadd.f32 %v535, %v572
    %v580 = vadd.f32 %v536, %v575
    %581 = vmatprep.subr.bf16.mxu0 0
    %582 = vmatpush1.bf16.msra.mxu0 %v578
    %583 = vmatprep.subr.bf16.mxu0 0
    %584 = vmatpush1.bf16.msra.mxu0 0
    %585 = vmatprep.subr.bf16.mxu0 0
    %586 = vmatpush1.bf16.msra.mxu0 0
    %587 = vmatprep.subr.bf16.mxu0 0
    %588 = vmatpush1.bf16.msra.mxu0 0
    %589 = vmatprep.subr.bf16.mxu0 0
    %590 = vmatpush1.bf16.msra.mxu0 0
    %591 = vmatprep.subr.bf16.mxu0 0
    %592 = vmatpush1.bf16.msra.mxu0 0
    %593 = vmatprep.subr.bf16.mxu0 0
    %594 = vmatpush1.bf16.msra.mxu0 0
    %595 = vmatprep.subr.bf16.mxu0 0
    %596 = vmatpush1.bf16.msra.mxu0 0
    %597 = vmatprep.subr.bf16.mxu0 0
    %598 = vmatpush1.bf16.msra.mxu0 0
    %599 = vmatprep.subr.bf16.mxu0 0
    %600 = vmatpush1.bf16.msra.mxu0 0
    %601 = vmatprep.subr.bf16.mxu0 0
    %602 = vmatpush1.bf16.msra.mxu0 0
    %603 = vmatprep.subr.bf16.mxu0 0
    %604 = vmatpush1.bf16.msra.mxu0 0
    %605 = vmatprep.subr.bf16.mxu0 0
    %606 = vmatpush1.bf16.msra.mxu0 0
    %607 = vmatprep.subr.bf16.mxu0 0
    %608 = vmatpush1.bf16.msra.mxu0 0
    %609 = vmatprep.subr.bf16.mxu0 0
    %610 = vmatpush1.bf16.msra.mxu0 0
    %611 = vmatprep.subr.bf16.mxu0 0
    %612 = vmatpush1.bf16.msra.mxu0 0
    %613 = vmatprep.mubr.bf16.mxu0 0
    %614 = vmatmul.mubr.bf16.gmra.mrb[0].mxu0 %v227
    %v615 = vpop.f32.mrb[0].mxu0
    %v616 = vadd.f32 0.0, %v615
    %v617 = vpop.f32.mrb[0].mxu0
    %v618 = vpop.f32.mrb[0].mxu0
    %v619 = vadd.f32 0.0, %v618
    %v620 = vpop.f32.mrb[0].mxu0
    %621 = vdwg.mxu0
    %v622 = vpack.c.bf16 %v619, %v616
    %v623 = vadd.f32 %v579, %v616
    %v624 = vadd.f32 %v580, %v619
    %625 = vmatprep.subr.bf16.mxu0 0
    %626 = vmatpush1.bf16.msra.mxu0 %v622
    %627 = vmatprep.subr.bf16.mxu0 0
    %628 = vmatpush1.bf16.msra.mxu0 0
    %629 = vmatprep.subr.bf16.mxu0 0
    %630 = vmatpush1.bf16.msra.mxu0 0
    %631 = vmatprep.subr.bf16.mxu0 0
    %632 = vmatpush1.bf16.msra.mxu0 0
    %633 = vmatprep.subr.bf16.mxu0 0
    %634 = vmatpush1.bf16.msra.mxu0 0
    %635 = vmatprep.subr.bf16.mxu0 0
    %636 = vmatpush1.bf16.msra.mxu0 0
    %637 = vmatprep.subr.bf16.mxu0 0
    %638 = vmatpush1.bf16.msra.mxu0 0
    %639 = vmatprep.subr.bf16.mxu0 0
    %640 = vmatpush1.bf16.msra.mxu0 0
    %641 = vmatprep.subr.bf16.mxu0 0
    %642 = vmatpush1.bf16.msra.mxu0 0
    %643 = vmatprep.subr.bf16.mxu0 0
    %644 = vmatpush1.bf16.msra.mxu0 0
    %645 = vmatprep.subr.bf16.mxu0 0
    %646 = vmatpush1.bf16.msra.mxu0 0
    %647 = vmatprep.subr.bf16.mxu0 0
    %648 = vmatpush1.bf16.msra.mxu0 0
    %649 = vmatprep.subr.bf16.mxu0 0
    %650 = vmatpush1.bf16.msra.mxu0 0
    %651 = vmatprep.subr.bf16.mxu0 0
    %652 = vmatpush1.bf16.msra.mxu0 0
    %653 = vmatprep.subr.bf16.mxu0 0
    %654 = vmatpush1.bf16.msra.mxu0 0
    %655 = vmatprep.subr.bf16.mxu0 0
    %656 = vmatpush1.bf16.msra.mxu0 0
    %657 = vmatprep.mubr.bf16.mxu0 0
    %658 = vmatmul.mubr.bf16.gmra.mrb[0].mxu0 %v227
    %v659 = vpop.f32.mrb[0].mxu0
    %v660 = vadd.f32 0.0, %v659
    %v661 = vpop.f32.mrb[0].mxu0
    %v662 = vpop.f32.mrb[0].mxu0
    %v663 = vadd.f32 0.0, %v662
    %v664 = vpop.f32.mrb[0].mxu0
    %665 = vdwg.mxu0
    %v666 = vpack.c.bf16 %v663, %v660
    %v667 = vadd.f32 %v623, %v660
    %v668 = vadd.f32 %v624, %v663
    %669 = vmatprep.subr.bf16.mxu0 0
    %670 = vmatpush1.bf16.msra.mxu0 %v666
    %671 = vmatprep.subr.bf16.mxu0 0
    %672 = vmatpush1.bf16.msra.mxu0 0
    %673 = vmatprep.subr.bf16.mxu0 0
    %674 = vmatpush1.bf16.msra.mxu0 0
    %675 = vmatprep.subr.bf16.mxu0 0
    %676 = vmatpush1.bf16.msra.mxu0 0
    %677 = vmatprep.subr.bf16.mxu0 0
    %678 = vmatpush1.bf16.msra.mxu0 0
    %679 = vmatprep.subr.bf16.mxu0 0
    %680 = vmatpush1.bf16.msra.mxu0 0
    %681 = vmatprep.subr.bf16.mxu0 0
    %682 = vmatpush1.bf16.msra.mxu0 0
    %683 = vmatprep.subr.bf16.mxu0 0
    %684 = vmatpush1.bf16.msra.mxu0 0
    %685 = vmatprep.subr.bf16.mxu0 0
    %686 = vmatpush1.bf16.msra.mxu0 0
    %687 = vmatprep.subr.bf16.mxu0 0
    %688 = vmatpush1.bf16.msra.mxu0 0
    %689 = vmatprep.subr.bf16.mxu0 0
    %690 = vmatpush1.bf16.msra.mxu0 0
    %691 = vmatprep.subr.bf16.mxu0 0
    %692 = vmatpush1.bf16.msra.mxu0 0
    %693 = vmatprep.subr.bf16.mxu0 0
    %694 = vmatpush1.bf16.msra.mxu0 0
    %695 = vmatprep.subr.bf16.mxu0 0
    %696 = vmatpush1.bf16.msra.mxu0 0
    %697 = vmatprep.subr.bf16.mxu0 0
    %698 = vmatpush1.bf16.msra.mxu0 0
    %699 = vmatprep.subr.bf16.mxu0 0
    %700 = vmatpush1.bf16.msra.mxu0 0
    %701 = vmatprep.mubr.bf16.mxu0 0
    %702 = vmatmul.mubr.bf16.gmra.mrb[0].mxu0 %v227
    %v703 = vpop.f32.mrb[0].mxu0
    %v704 = vadd.f32 0.0, %v703
    %v705 = vpop.f32.mrb[0].mxu0
    %v706 = vpop.f32.mrb[0].mxu0
    %v707 = vadd.f32 0.0, %v706
    %v708 = vpop.f32.mrb[0].mxu0
    %709 = vdwg.mxu0
    %v710 = vpack.c.bf16 %v707, %v704
    %v711 = vadd.f32 %v667, %v704
    %v712 = vadd.f32 %v668, %v707
    %713 = vmatprep.subr.bf16.mxu0 0
    %714 = vmatpush1.bf16.msra.mxu0 %v710
    %715 = vmatprep.subr.bf16.mxu0 0
    %716 = vmatpush1.bf16.msra.mxu0 0
    %717 = vmatprep.subr.bf16.mxu0 0
    %718 = vmatpush1.bf16.msra.mxu0 0
    %719 = vmatprep.subr.bf16.mxu0 0
    %720 = vmatpush1.bf16.msra.mxu0 0
    %721 = vmatprep.subr.bf16.mxu0 0
    %722 = vmatpush1.bf16.msra.mxu0 0
    %723 = vmatprep.subr.bf16.mxu0 0
    %724 = vmatpush1.bf16.msra.mxu0 0
    %725 = vmatprep.subr.bf16.mxu0 0
    %726 = vmatpush1.bf16.msra.mxu0 0
    %727 = vmatprep.subr.bf16.mxu0 0
    %728 = vmatpush1.bf16.msra.mxu0 0
    %729 = vmatprep.subr.bf16.mxu0 0
    %730 = vmatpush1.bf16.msra.mxu0 0
    %731 = vmatprep.subr.bf16.mxu0 0
    %732 = vmatpush1.bf16.msra.mxu0 0
    %733 = vmatprep.subr.bf16.mxu0 0
    %734 = vmatpush1.bf16.msra.mxu0 0
    %735 = vmatprep.subr.bf16.mxu0 0
    %736 = vmatpush1.bf16.msra.mxu0 0
    %737 = vmatprep.subr.bf16.mxu0 0
    %738 = vmatpush1.bf16.msra.mxu0 0
    %739 = vmatprep.subr.bf16.mxu0 0
    %740 = vmatpush1.bf16.msra.mxu0 0
    %741 = vmatprep.subr.bf16.mxu0 0
    %742 = vmatpush1.bf16.msra.mxu0 0
    %743 = vmatprep.subr.bf16.mxu0 0
    %744 = vmatpush1.bf16.msra.mxu0 0
    %745 = vmatprep.mubr.bf16.mxu0 0
    %746 = vmatmul.mubr.bf16.gmra.mrb[0].mxu0 %v227
    %v747 = vpop.f32.mrb[0].mxu0
    %v748 = vadd.f32 0.0, %v747
    %v749 = vpop.f32.mrb[0].mxu0
    %v750 = vpop.f32.mrb[0].mxu0
    %v751 = vadd.f32 0.0, %v750
    %v752 = vpop.f32.mrb[0].mxu0
    %753 = vdwg.mxu0
    %v754 = vpack.c.bf16 %v751, %v748
    %v755 = vadd.f32 %v711, %v748
    %v756 = vadd.f32 %v712, %v751
    %757 = vmatprep.subr.bf16.mxu0 0
    %758 = vmatpush1.bf16.msra.mxu0 %v754
    %759 = vmatprep.subr.bf16.mxu0 0
    %760 = vmatpush1.bf16.msra.mxu0 0
    %761 = vmatprep.subr.bf16.mxu0 0
    %762 = vmatpush1.bf16.msra.mxu0 0
    %763 = vmatprep.subr.bf16.mxu0 0
    %764 = vmatpush1.bf16.msra.mxu0 0
    %765 = vmatprep.subr.bf16.mxu0 0
    %766 = vmatpush1.bf16.msra.mxu0 0
    %767 = vmatprep.subr.bf16.mxu0 0
    %768 = vmatpush1.bf16.msra.mxu0 0
    %769 = vmatprep.subr.bf16.mxu0 0
    %770 = vmatpush1.bf16.msra.mxu0 0
    %771 = vmatprep.subr.bf16.mxu0 0
    %772 = vmatpush1.bf16.msra.mxu0 0
    %773 = vmatprep.subr.bf16.mxu0 0
    %774 = vmatpush1.bf16.msra.mxu0 0
    %775 = vmatprep.subr.bf16.mxu0 0
    %776 = vmatpush1.bf16.msra.mxu0 0
    %777 = vmatprep.subr.bf16.mxu0 0
    %778 = vmatpush1.bf16.msra.mxu0 0
    %779 = vmatprep.subr.bf16.mxu0 0
    %780 = vmatpush1.bf16.msra.mxu0 0
    %781 = vmatprep.subr.bf16.mxu0 0
    %782 = vmatpush1.bf16.msra.mxu0 0
    %783 = vmatprep.subr.bf16.mxu0 0
    %784 = vmatpush1.bf16.msra.mxu0 0
    %785 = vmatprep.subr.bf16.mxu0 0
    %786 = vmatpush1.bf16.msra.mxu0 0
    %787 = vmatprep.subr.bf16.mxu0 0
    %788 = vmatpush1.bf16.msra.mxu0 0
    %789 = vmatprep.mubr.bf16.mxu0 0
    %790 = vmatmul.mubr.bf16.gmra.mrb[0].mxu0 %v227
    %v791 = vpop.f32.mrb[0].mxu0
    %v792 = vadd.f32 0.0, %v791
    %v793 = vpop.f32.mrb[0].mxu0
    %v794 = vpop.f32.mrb[0].mxu0
    %v795 = vadd.f32 0.0, %v794
    %v796 = vpop.f32.mrb[0].mxu0
    %797 = vdwg.mxu0
    %v798 = vpack.c.bf16 %v795, %v792
    %v799 = vadd.f32 %v755, %v792
    %v800 = vadd.f32 %v756, %v795
    %801 = vmatprep.subr.bf16.mxu0 0
    %802 = vmatpush1.bf16.msra.mxu0 %v798
    %803 = vmatprep.subr.bf16.mxu0 0
    %804 = vmatpush1.bf16.msra.mxu0 0
    %805 = vmatprep.subr.bf16.mxu0 0
    %806 = vmatpush1.bf16.msra.mxu0 0
    %807 = vmatprep.subr.bf16.mxu0 0
    %808 = vmatpush1.bf16.msra.mxu0 0
    %809 = vmatprep.subr.bf16.mxu0 0
    %810 = vmatpush1.bf16.msra.mxu0 0
    %811 = vmatprep.subr.bf16.mxu0 0
    %812 = vmatpush1.bf16.msra.mxu0 0
    %813 = vmatprep.subr.bf16.mxu0 0
    %814 = vmatpush1.bf16.msra.mxu0 0
    %815 = vmatprep.subr.bf16.mxu0 0
    %816 = vmatpush1.bf16.msra.mxu0 0
    %817 = vmatprep.subr.bf16.mxu0 0
    %818 = vmatpush1.bf16.msra.mxu0 0
    %819 = vmatprep.subr.bf16.mxu0 0
    %820 = vmatpush1.bf16.msra.mxu0 0
    %821 = vmatprep.subr.bf16.mxu0 0
    %822 = vmatpush1.bf16.msra.mxu0 0
    %823 = vmatprep.subr.bf16.mxu0 0
    %824 = vmatpush1.bf16.msra.mxu0 0
    %825 = vmatprep.subr.bf16.mxu0 0
    %826 = vmatpush1.bf16.msra.mxu0 0
    %827 = vmatprep.subr.bf16.mxu0 0
    %828 = vmatpush1.bf16.msra.mxu0 0
    %829 = vmatprep.subr.bf16.mxu0 0
    %830 = vmatpush1.bf16.msra.mxu0 0
    %831 = vmatprep.subr.bf16.mxu0 0
    %832 = vmatpush1.bf16.msra.mxu0 0
    %833 = vmatprep.mubr.bf16.mxu0 0
    %834 = vmatmul.mubr.bf16.gmra.mrb[0].mxu0 %v227
    %v835 = vpop.f32.mrb[0].mxu0
    %v836 = vadd.f32 0.0, %v835
    %v837 = vpop.f32.mrb[0].mxu0
    %v838 = vpop.f32.mrb[0].mxu0
    %v839 = vadd.f32 0.0, %v838
    %v840 = vpop.f32.mrb[0].mxu0
    %841 = vdwg.mxu0
    %v842 = vpack.c.bf16 %v839, %v836
    %v843 = vadd.f32 %v799, %v836
    %v844 = vadd.f32 %v800, %v839
    %845 = vmatprep.subr.bf16.mxu0 0
    %846 = vmatpush1.bf16.msra.mxu0 %v842
    %847 = vmatprep.subr.bf16.mxu0 0
    %848 = vmatpush1.bf16.msra.mxu0 0
    %849 = vmatprep.subr.bf16.mxu0 0
    %850 = vmatpush1.bf16.msra.mxu0 0
    %851 = vmatprep.subr.bf16.mxu0 0
    %852 = vmatpush1.bf16.msra.mxu0 0
    %853 = vmatprep.subr.bf16.mxu0 0
    %854 = vmatpush1.bf16.msra.mxu0 0
    %855 = vmatprep.subr.bf16.mxu0 0
    %856 = vmatpush1.bf16.msra.mxu0 0
    %857 = vmatprep.subr.bf16.mxu0 0
    %858 = vmatpush1.bf16.msra.mxu0 0
    %859 = vmatprep.subr.bf16.mxu0 0
    %860 = vmatpush1.bf16.msra.mxu0 0
    %861 = vmatprep.subr.bf16.mxu0 0
    %862 = vmatpush1.bf16.msra.mxu0 0
    %863 = vmatprep.subr.bf16.mxu0 0
    %864 = vmatpush1.bf16.msra.mxu0 0
    %865 = vmatprep.subr.bf16.mxu0 0
    %866 = vmatpush1.bf16.msra.mxu0 0
    %867 = vmatprep.subr.bf16.mxu0 0
    %868 = vmatpush1.bf16.msra.mxu0 0
    %869 = vmatprep.subr.bf16.mxu0 0
    %870 = vmatpush1.bf16.msra.mxu0 0
    %871 = vmatprep.subr.bf16.mxu0 0
    %872 = vmatpush1.bf16.msra.mxu0 0
    %873 = vmatprep.subr.bf16.mxu0 0
    %874 = vmatpush1.bf16.msra.mxu0 0
    %875 = vmatprep.subr.bf16.mxu0 0
    %876 = vmatpush1.bf16.msra.mxu0 0
    %877 = vmatprep.mubr.bf16.mxu0 0
    %878 = vmatmul.mubr.bf16.gmra.mrb[0].mxu0 %v227
    %v879 = vpop.f32.mrb[0].mxu0
    %v880 = vadd.f32 0.0, %v879
    %v881 = vpop.f32.mrb[0].mxu0
    %v882 = vpop.f32.mrb[0].mxu0
    %v883 = vadd.f32 0.0, %v882
    %v884 = vpop.f32.mrb[0].mxu0
    %885 = vdwg.mxu0
    %v886 = vpack.c.bf16 %v883, %v880
    %v887 = vadd.f32 %v843, %v880
    %v888 = vadd.f32 %v844, %v883
    %889 = vmatprep.subr.bf16.mxu0 0
    %890 = vmatpush1.bf16.msra.mxu0 %v886
    %891 = vmatprep.subr.bf16.mxu0 0
    %892 = vmatpush1.bf16.msra.mxu0 0
    %893 = vmatprep.subr.bf16.mxu0 0
    %894 = vmatpush1.bf16.msra.mxu0 0
    %895 = vmatprep.subr.bf16.mxu0 0
    %896 = vmatpush1.bf16.msra.mxu0 0
    %897 = vmatprep.subr.bf16.mxu0 0
    %898 = vmatpush1.bf16.msra.mxu0 0
    %899 = vmatprep.subr.bf16.mxu0 0
    %900 = vmatpush1.bf16.msra.mxu0 0
    %901 = vmatprep.subr.bf16.mxu0 0
    %902 = vmatpush1.bf16.msra.mxu0 0
    %903 = vmatprep.subr.bf16.mxu0 0
    %904 = vmatpush1.bf16.msra.mxu0 0
    %905 = vmatprep.subr.bf16.mxu0 0
    %906 = vmatpush1.bf16.msra.mxu0 0
    %907 = vmatprep.subr.bf16.mxu0 0
    %908 = vmatpush1.bf16.msra.mxu0 0
    %909 = vmatprep.subr.bf16.mxu0 0
    %910 = vmatpush1.bf16.msra.mxu0 0
    %911 = vmatprep.subr.bf16.mxu0 0
    %912 = vmatpush1.bf16.msra.mxu0 0
    %913 = vmatprep.subr.bf16.mxu0 0
    %914 = vmatpush1.bf16.msra.mxu0 0
    %915 = vmatprep.subr.bf16.mxu0 0
    %916 = vmatpush1.bf16.msra.mxu0 0
    %917 = vmatprep.subr.bf16.mxu0 0
    %918 = vmatpush1.bf16.msra.mxu0 0
    %919 = vmatprep.subr.bf16.mxu0 0
    %920 = vmatpush1.bf16.msra.mxu0 0
    %921 = vmatprep.mubr.bf16.mxu0 0
    %922 = vmatmul.mubr.bf16.gmra.mrb[0].mxu0 %v227
    %v923 = vpop.f32.mrb[0].mxu0
    %v924 = vadd.f32 0.0, %v923
    %v925 = vpop.f32.mrb[0].mxu0
    %v926 = vpop.f32.mrb[0].mxu0
    %v927 = vadd.f32 0.0, %v926
    %v928 = vpop.f32.mrb[0].mxu0
    %929 = vdwg.mxu0
    %v930 = vadd.f32 %v887, %v924
    %v931 = vadd.f32 %v888, %v927
    %v932 = vmul.f32 %v930, 0.0625
    %v933 = vmul.f32 %v931, 0.0625
    %934 = vst [vmem:[#allocation10] sm:$0xff] %v932
    %935 = vst [vmem:[#allocation10 + $0x8] sm:$0xff] %v933
    // Predicated region
    $region42: #{tpu_custom_call.1} parent=1 // pred_check
      _
    $region43: #{tpu_custom_call.1} parent=1 // pred_check_branch
      %937 = sbr.rel (0) target = $region45
    $region44: #{tpu_custom_call.1} parent=1 // pred_region
      %s939 = ssub.s32 256, 256
      %940 = vsyncadd [#allocation4], %s939
      %s941 = sshll.u32 [#allocation10], 4
      %s942 = int_to_ptr.vmem [resolvable:$true] %s941
      %947 = dma.vmem_to_hbm [thread:$0]  %s942, 256, %s6, [#allocation4], 128, 128, 8
    $region45: #{tpu_custom_call.1} parent=1 // pred_fallthru
      _
    // Predicated region
    $region46: #{tpu_custom_call.1} parent=1 // pred_check
      _
    $region47: #{tpu_custom_call.1} parent=1 // pred_check_branch
      %949 = sbr.rel (0) target = $region49
    $region48: #{tpu_custom_call.1} parent=1 // pred_region
      %950 = dma.done [#allocation4], 256
    $region49: #{tpu_custom_call.1} parent=1 // pred_fallthru
      _
    %951 = vsyncpa [#allocation3], 1
    %952 = vsyncpa [#allocation6], 1
    %953 = vsyncpa [#allocation9], 1
    %954 = vsyncpa [#allocation4], 1

</llo_original>
